<compile_context>
chip_gen: v5e
topology: v5e:2x2
jax: 0.10.0
libtpu: 0.0.40
codegen_flags: <defaults>
</compile_context>

<pallas_src>
import functools
import math

import jax
import jax.numpy as jnp
from jax.experimental import pallas as pl
from jax.experimental.pallas import tpu as pltpu


def _round_up(x: int, m: int) -> int:
    return (x + m - 1) // m * m


def _final_layer_kernel(x_ref, w1_ref, b1_ref, v_ref, c_ref, o_ref, *,
                        eps: float, h_dim: int):
    # x_ref: (TM, D) native dtype; w1_ref: (D, H) same dtype; b1/v: (1, H) f32;
    # c: (1, 1) f32; o: (TM, 1) f32.
    x = x_ref[...]

    # Linear 1 + ReLU (MXU matmul, f32 accumulate; bf16 inputs hit the native MXU path).
    h = jnp.dot(x, w1_ref[...], preferred_element_type=jnp.float32) + b1_ref[...]
    h = jnp.maximum(h, 0.0)                                          # (TM, H) f32

    # torch-style LayerNorm stats: unbiased std (ddof = 1), eps added to std.
    mean = jnp.mean(h, axis=-1, keepdims=True)                       # (TM, 1)
    centered = h - mean
    var = jnp.sum(centered * centered, axis=-1, keepdims=True) * (1.0 / (h_dim - 1))
    inv = 1.0 / (jnp.sqrt(var) + eps)                                # per-row reciprocal

    # Folded LayerNorm-affine + Linear2:
    #   logits = inv * sum((h - mean) * (a2*w2), -1) + (dot(b2_ln, w2) + b2)
    logits = jnp.sum(centered * v_ref[...], axis=-1, keepdims=True) * inv + c_ref[...]
    o_ref[...] = jax.nn.sigmoid(logits).astype(o_ref.dtype)


def tran_final_layer(x, w1, b1, a2, b2_ln, w2, b2, *,
                     eps: float = 1e-6, block_rows: int = 1024):
    """Fused TranFinalLayer forward.

    x:  (..., D)  (any float dtype; bf16 recommended -- no upcast pass is done)
    w1: (D, H)    [= torch w_1.weight.T],  b1: (H,)
    a2, b2_ln: (H,)  LayerNorm scale / shift
    w2: (H,)      [= torch w_2.weight row], b2: scalar
    returns: sigmoid logits with shape x.shape[:-1], float32
    """
    *lead, D = x.shape
    H = D // 2
    assert w1.shape == (D, H), "w1 must be (d_model, d_model//2) (torch weight transposed)"
    assert H > 1, "d_model//2 must be > 1 (unbiased std divides by H-1)"

    M = math.prod(lead) if lead else 1
    xf = x.reshape(M, D)                       # native dtype -- no extra HBM pass

    # Match the matmul operand dtype to x (bf16 x bf16 on the MXU when x is bf16).
    w1c = w1.astype(x.dtype)
    # Fold LayerNorm affine + Linear2 into one reduction vector / scalar.
    w2f = w2.astype(jnp.float32)
    v = (a2.astype(jnp.float32) * w2f).reshape(1, H)
    c = (jnp.dot(b2_ln.astype(jnp.float32), w2f)
         + jnp.asarray(b2, jnp.float32)).reshape(1, 1)
    b1r = b1.reshape(1, H).astype(jnp.float32)

    # Row tiling: big, 8-row-aligned blocks; last grid step may be partial (no pad).
    tm = min(block_rows, _round_up(M, 8))
    grid = (pl.cdiv(M, tm),)

    x_item = jnp.dtype(xf.dtype).itemsize
    w_item = jnp.dtype(w1c.dtype).itemsize

    # Explicit scoped-VMEM budget: x double buffer + weights (conservatively 2 bufs)
    # + small vectors + out double buffer + in-kernel (TM,H) temporaries, ~30% headroom.
    budget = (2 * tm * D * x_item
              + 2 * D * H * w_item
              + 2 * (2 * H + 8) * 4
              + 2 * tm * 4
              + 3 * tm * H * 4)
    vmem_limit = min(max(int(1.3 * budget) + (2 << 20), 24 << 20), 64 << 20)

    # Advisory cost hint (reflects real bytes: native-dtype x, no pad inflation).
    cost = pl.CostEstimate(
        flops=int(M * (2 * D * H + 10 * H)),
        transcendentals=int(3 * M),
        bytes_accessed=int(M * D * x_item + M * 4
                           + D * H * w_item + (2 * H + 1) * 4),
    )

    kernel = functools.partial(_final_layer_kernel, eps=float(eps), h_dim=H)

    def build(single_buffer_weights: bool):
        const = {"pipeline_mode": pl.Buffered(1)} if single_buffer_weights else {}
        in_specs = [
            pl.BlockSpec((tm, D), lambda i: (i, 0)),             # x row tile
            pl.BlockSpec((D, H), lambda i: (0, 0), **const),     # W1 (VMEM-resident)
            pl.BlockSpec((1, H), lambda i: (0, 0), **const),     # b1
            pl.BlockSpec((1, H), lambda i: (0, 0), **const),     # v = a2 * w2
            pl.BlockSpec((1, 1), lambda i: (0, 0), **const),     # c = b2_ln.w2 + b2
        ]
        return pl.pallas_call(
            kernel,
            out_shape=jax.ShapeDtypeStruct((M, 1), jnp.float32),
            grid_spec=pltpu.PrefetchScalarGridSpec(
                num_scalar_prefetch=0,
                grid=grid,
                in_specs=in_specs,
                out_specs=pl.BlockSpec((tm, 1), lambda i: (i, 0)),
            ),
            compiler_params=pltpu.CompilerParams(
                dimension_semantics=("parallel",),
                vmem_limit_bytes=vmem_limit),
            cost_estimate=cost,
        )

    args = (xf, w1c, b1r, v, c)
    try:
        out = build(True)(*args)
    except Exception:
        # Older jax without BlockSpec(pipeline_mode=...): fall back to default buffering.
        out = build(False)(*args)

    return out[:, 0].reshape(tuple(lead))


def _ref_forward(x, w1, b1, a2, b2_ln, w2, b2, eps=1e-6):
    """Plain-JAX reference with the same (unfused) math as the torch module."""
    h = jnp.maximum(jnp.dot(x, w1) + b1, 0.0)
    mean = h.mean(-1, keepdims=True)
    var = jnp.sum((h - mean) ** 2, axis=-1, keepdims=True) / (h.shape[-1] - 1)
    std = jnp.sqrt(var)
    n = a2 * (h - mean) / (std + eps) + b2_ln
    logits = jnp.sum(n * w2, axis=-1) + b2
    return jax.nn.sigmoid(logits)


if __name__ == "__main__":
    # Small deterministic example: batch=2, seq=8, d_model=32 (hidden H=16).
    B, S, D = 2, 8, 32
    H = D // 2
    key = jax.random.PRNGKey(0)
    kx, k1, k2, k3, k4, k5, k6, k7 = jax.random.split(key, 8)

    def bf16_grid(a):
        # Quantize to bf16-representable values so the kernel's bf16 MXU passes and
        # the reference's f32 matmul agree to f32-accumulation error.
        return a.astype(jnp.bfloat16).astype(jnp.float32)

    x = bf16_grid(jax.random.normal(kx, (B, S, D), dtype=jnp.float32))
    w1 = bf16_grid(jax.random.normal(k1, (D, H), dtype=jnp.float32) / math.sqrt(D))
    b1 = 0.1 * jax.random.normal(k2, (H,), dtype=jnp.float32)
    # LayerNorm params (torch inits ones/zeros; perturbed to exercise them).
    a2 = jnp.ones((H,), jnp.float32) + 0.1 * jax.random.normal(k3, (H,), dtype=jnp.float32)
    b2_ln = 0.1 * jax.random.normal(k4, (H,), dtype=jnp.float32)
    w2 = jax.random.normal(k5, (H,), dtype=jnp.float32) / math.sqrt(H)
    b2 = 0.1 * jax.random.normal(k6, (), dtype=jnp.float32)

    ref = _ref_forward(x, w1, b1, a2, b2_ln, w2, b2)

    # Primary path: bf16 activations (halves the dominant HBM read).
    out = tran_final_layer(x.astype(jnp.bfloat16), w1, b1, a2, b2_ln, w2, b2)
    out = jax.block_until_ready(out)
    assert out.shape == (B, S), f"bad output shape {out.shape}"
    assert jnp.allclose(out, ref, atol=1e-4, rtol=1e-4), "bf16-path mismatch vs reference"

    # Secondary check: f32 activations + ragged row count (exercises the no-pad
    # partial last block; tail garbage rows are row-local and discarded).
    x2 = bf16_grid(jax.random.normal(k7, (3, 5, D), dtype=jnp.float32))
    out2 = jax.block_until_ready(tran_final_layer(x2, w1, b1, a2, b2_ln, w2, b2))
    ref2 = _ref_forward(x2, w1, b1, a2, b2_ln, w2, b2)
    assert out2.shape == (3, 5), f"bad output shape {out2.shape}"
    assert jnp.allclose(out2, ref2, atol=1e-4, rtol=1e-4), "ragged-M mismatch vs reference"

    print("KERNEL_OK")
</pallas_src>

<mosaic_0001>
module attributes {stable_mosaic.version = 11 : i64} {
  func.func @_final_layer_kernel(%arg0: i32, %arg1: memref<16x32xbf16, #tpu.memory_space<vmem>>, %arg2: memref<32x16xbf16, #tpu.memory_space<vmem>>, %arg3: memref<1x16xf32, #tpu.memory_space<vmem>>, %arg4: memref<1x16xf32, #tpu.memory_space<vmem>>, %arg5: memref<1x1xf32, #tpu.memory_space<vmem>>, %arg6: memref<16x1xf32, #tpu.memory_space<vmem>>) attributes {dimension_semantics = [#tpu.dimension_semantics<parallel>], iteration_bounds = array<i64: 1>, scalar_prefetch = 0 : i64, scratch_operands = 0 : i64, tpu.core_type = #tpu.core_type<tc>, window_params = [{transform_indices = @transform_0, window_bounds = array<i64: 16, 32>}, {pipeline_mode = #tpu.pipeline_mode<synchronous>, transform_indices = @transform_1, window_bounds = array<i64: 32, 16>}, {pipeline_mode = #tpu.pipeline_mode<synchronous>, transform_indices = @transform_2, window_bounds = array<i64: 1, 16>}, {pipeline_mode = #tpu.pipeline_mode<synchronous>, transform_indices = @transform_3, window_bounds = array<i64: 1, 16>}, {pipeline_mode = #tpu.pipeline_mode<synchronous>, transform_indices = @transform_4, window_bounds = array<i64: 1, 1>}, {transform_indices = @transform_5, window_bounds = array<i64: 16, 1>}]} {
    %c0 = arith.constant 0 : index
    %c0_0 = arith.constant 0 : index
    %0 = vector.load %arg1[%c0, %c0_0] : memref<16x32xbf16, #tpu.memory_space<vmem>>, vector<16x32xbf16>
    %c0_1 = arith.constant 0 : index
    %c0_2 = arith.constant 0 : index
    %1 = vector.load %arg2[%c0_1, %c0_2] : memref<32x16xbf16, #tpu.memory_space<vmem>>, vector<32x16xbf16>
    %cst = arith.constant dense<0.000000e+00> : vector<16x16xf32>
    %2 = tpu.matmul %0, %1, %cst {dimension_numbers = #tpu.dot_dimension_numbers<[1], [0], [0], [1], [0, 0, 1, 1], [], []>} : vector<16x32xbf16>, vector<32x16xbf16>, vector<16x16xf32> -> vector<16x16xf32>
    %c0_3 = arith.constant 0 : index
    %c0_4 = arith.constant 0 : index
    %3 = vector.load %arg3[%c0_3, %c0_4] : memref<1x16xf32, #tpu.memory_space<vmem>>, vector<1x16xf32>
    %4 = vector.broadcast %3 : vector<1x16xf32> to vector<16x16xf32>
    %5 = arith.addf %2, %4 : vector<16x16xf32>
    %cst_5 = arith.constant 0.000000e+00 : f32
    %6 = vector.broadcast %cst_5 : f32 to vector<16x16xf32>
    %7 = arith.maximumf %5, %6 : vector<16x16xf32>
    %cst_6 = arith.constant dense<0.000000e+00> : vector<16xf32>
    %8 = vector.multi_reduction <add>, %7, %cst_6 [1] : vector<16x16xf32> to vector<16xf32>
    %9 = vector.shape_cast %8 : vector<16xf32> to vector<16x1xf32>
    %cst_7 = arith.constant 1.600000e+01 : f32
    %10 = vector.broadcast %cst_7 : f32 to vector<16x1xf32>
    %11 = arith.divf %9, %10 : vector<16x1xf32>
    %12 = vector.broadcast %11 : vector<16x1xf32> to vector<16x16xf32>
    %13 = arith.subf %7, %12 : vector<16x16xf32>
    %14 = arith.mulf %13, %13 : vector<16x16xf32>
    %cst_8 = arith.constant dense<0.000000e+00> : vector<16xf32>
    %15 = vector.multi_reduction <add>, %14, %cst_8 [1] : vector<16x16xf32> to vector<16xf32>
    %16 = vector.shape_cast %15 : vector<16xf32> to vector<16x1xf32>
    %cst_9 = arith.constant 0.0666666701 : f32
    %17 = vector.broadcast %cst_9 : f32 to vector<16x1xf32>
    %18 = arith.mulf %16, %17 : vector<16x1xf32>
    %19 = math.sqrt %18 : vector<16x1xf32>
    %cst_10 = arith.constant 9.99999997E-7 : f32
    %20 = vector.broadcast %cst_10 : f32 to vector<16x1xf32>
    %21 = arith.addf %19, %20 : vector<16x1xf32>
    %cst_11 = arith.constant 1.000000e+00 : f32
    %22 = vector.broadcast %cst_11 : f32 to vector<16x1xf32>
    %23 = arith.divf %22, %21 : vector<16x1xf32>
    %c0_12 = arith.constant 0 : index
    %c0_13 = arith.constant 0 : index
    %24 = vector.load %arg4[%c0_12, %c0_13] : memref<1x16xf32, #tpu.memory_space<vmem>>, vector<1x16xf32>
    %25 = vector.broadcast %24 : vector<1x16xf32> to vector<16x16xf32>
    %26 = arith.mulf %13, %25 : vector<16x16xf32>
    %cst_14 = arith.constant dense<0.000000e+00> : vector<16xf32>
    %27 = vector.multi_reduction <add>, %26, %cst_14 [1] : vector<16x16xf32> to vector<16xf32>
    %28 = vector.shape_cast %27 : vector<16xf32> to vector<16x1xf32>
    %29 = arith.mulf %28, %23 : vector<16x1xf32>
    %c0_15 = arith.constant 0 : index
    %c0_16 = arith.constant 0 : index
    %30 = vector.load %arg5[%c0_15, %c0_16] : memref<1x1xf32, #tpu.memory_space<vmem>>, vector<1x1xf32>
    %31 = vector.broadcast %30 : vector<1x1xf32> to vector<16x1xf32>
    %32 = arith.addf %29, %31 : vector<16x1xf32>
    %33 = arith.negf %32 : vector<16x1xf32>
    %34 = math.exp %33 : vector<16x1xf32>
    %cst_17 = arith.constant 1.000000e+00 : f32
    %35 = vector.broadcast %cst_17 : f32 to vector<16x1xf32>
    %36 = arith.addf %35, %34 : vector<16x1xf32>
    %37 = arith.divf %35, %36 : vector<16x1xf32>
    %c0_18 = arith.constant 0 : index
    %c0_19 = arith.constant 0 : index
    %38 = vector.load %arg6[%c0_18, %c0_19] : memref<16x1xf32, #tpu.memory_space<vmem>>, vector<16x1xf32>
    tpu.vector_store %arg6[%c0_18, %c0_19], %37 {strides = array<i32>} : memref<16x1xf32, #tpu.memory_space<vmem>>, vector<16x1xf32>,
    return
  }
  func.func @transform_0(%arg0: i32) -> (i32, i32) {
    %c0_i32 = arith.constant 0 : i32
    %c0_i32_0 = arith.constant 0 : i32
    return %arg0, %c0_i32 : i32, i32
  }
  func.func @transform_1(%arg0: i32) -> (i32, i32) {
    %c0_i32 = arith.constant 0 : i32
    %c0_i32_0 = arith.constant 0 : i32
    %c0_i32_1 = arith.constant 0 : i32
    return %c0_i32, %c0_i32_0 : i32, i32
  }
  func.func @transform_2(%arg0: i32) -> (i32, i32) {
    %c0_i32 = arith.constant 0 : i32
    %c0_i32_0 = arith.constant 0 : i32
    %c0_i32_1 = arith.constant 0 : i32
    return %c0_i32, %c0_i32_0 : i32, i32
  }
  func.func @transform_3(%arg0: i32) -> (i32, i32) {
    %c0_i32 = arith.constant 0 : i32
    %c0_i32_0 = arith.constant 0 : i32
    %c0_i32_1 = arith.constant 0 : i32
    return %c0_i32, %c0_i32_0 : i32, i32
  }
  func.func @transform_4(%arg0: i32) -> (i32, i32) {
    %c0_i32 = arith.constant 0 : i32
    %c0_i32_0 = arith.constant 0 : i32
    %c0_i32_1 = arith.constant 0 : i32
    return %c0_i32, %c0_i32_0 : i32, i32
  }
  func.func @transform_5(%arg0: i32) -> (i32, i32) {
    %c0_i32 = arith.constant 0 : i32
    %c0_i32_0 = arith.constant 0 : i32
    return %arg0, %c0_i32 : i32, i32
  }
}

module attributes {stable_mosaic.version = 11 : i64} {
  func.func @_final_layer_kernel(%arg0: i32, %arg1: memref<16x32xbf16, #tpu.memory_space<vmem>>, %arg2: memref<32x16xbf16, #tpu.memory_space<vmem>>, %arg3: memref<1x16xf32, #tpu.memory_space<vmem>>, %arg4: memref<1x16xf32, #tpu.memory_space<vmem>>, %arg5: memref<1x1xf32, #tpu.memory_space<vmem>>, %arg6: memref<16x1xf32, #tpu.memory_space<vmem>>) attributes {dimension_semantics = [#tpu.dimension_semantics<parallel>], iteration_bounds = array<i64: 1>, scalar_prefetch = 0 : i64, scratch_operands = 0 : i64, tpu.core_type = #tpu.core_type<tc>, window_params = [{transform_indices = @transform_0, window_bounds = array<i64: 16, 32>}, {pipeline_mode = #tpu.pipeline_mode<synchronous>, transform_indices = @transform_1, window_bounds = array<i64: 32, 16>}, {pipeline_mode = #tpu.pipeline_mode<synchronous>, transform_indices = @transform_2, window_bounds = array<i64: 1, 16>}, {pipeline_mode = #tpu.pipeline_mode<synchronous>, transform_indices = @transform_3, window_bounds = array<i64: 1, 16>}, {pipeline_mode = #tpu.pipeline_mode<synchronous>, transform_indices = @transform_4, window_bounds = array<i64: 1, 1>}, {transform_indices = @transform_5, window_bounds = array<i64: 16, 1>}]} {
    %c0 = arith.constant 0 : index
    %c0_0 = arith.constant 0 : index
    %0 = vector.load %arg1[%c0, %c0_0] : memref<16x32xbf16, #tpu.memory_space<vmem>>, vector<16x32xbf16>
    %c0_1 = arith.constant 0 : index
    %c0_2 = arith.constant 0 : index
    %1 = vector.load %arg2[%c0_1, %c0_2] : memref<32x16xbf16, #tpu.memory_space<vmem>>, vector<32x16xbf16>
    %cst = arith.constant dense<0.000000e+00> : vector<16x16xf32>
    %2 = tpu.matmul %0, %1, %cst {dimension_numbers = #tpu.dot_dimension_numbers<[1], [0], [0], [1], [0, 0, 1, 1], [], []>} : vector<16x32xbf16>, vector<32x16xbf16>, vector<16x16xf32> -> vector<16x16xf32>
    %c0_3 = arith.constant 0 : index
    %c0_4 = arith.constant 0 : index
    %3 = vector.load %arg3[%c0_3, %c0_4] : memref<1x16xf32, #tpu.memory_space<vmem>>, vector<1x16xf32>
    %4 = vector.broadcast %3 : vector<1x16xf32> to vector<16x16xf32>
    %5 = arith.addf %2, %4 : vector<16x16xf32>
    %cst_5 = arith.constant 0.000000e+00 : f32
    %6 = vector.broadcast %cst_5 : f32 to vector<16x16xf32>
    %7 = arith.maximumf %5, %6 : vector<16x16xf32>
    %cst_6 = arith.constant dense<0.000000e+00> : vector<16xf32>
    %8 = vector.multi_reduction <add>, %7, %cst_6 [1] : vector<16x16xf32> to vector<16xf32>
    %9 = vector.shape_cast %8 : vector<16xf32> to vector<16x1xf32>
    %cst_7 = arith.constant 1.600000e+01 : f32
    %10 = vector.broadcast %cst_7 : f32 to vector<16x1xf32>
    %11 = arith.divf %9, %10 : vector<16x1xf32>
    %12 = vector.broadcast %11 : vector<16x1xf32> to vector<16x16xf32>
    %13 = arith.subf %7, %12 : vector<16x16xf32>
    %14 = arith.mulf %13, %13 : vector<16x16xf32>
    %cst_8 = arith.constant dense<0.000000e+00> : vector<16xf32>
    %15 = vector.multi_reduction <add>, %14, %cst_8 [1] : vector<16x16xf32> to vector<16xf32>
    %16 = vector.shape_cast %15 : vector<16xf32> to vector<16x1xf32>
    %cst_9 = arith.constant 0.0666666701 : f32
    %17 = vector.broadcast %cst_9 : f32 to vector<16x1xf32>
    %18 = arith.mulf %16, %17 : vector<16x1xf32>
    %19 = math.sqrt %18 : vector<16x1xf32>
    %cst_10 = arith.constant 9.99999997E-7 : f32
    %20 = vector.broadcast %cst_10 : f32 to vector<16x1xf32>
    %21 = arith.addf %19, %20 : vector<16x1xf32>
    %cst_11 = arith.constant 1.000000e+00 : f32
    %22 = vector.broadcast %cst_11 : f32 to vector<16x1xf32>
    %23 = arith.divf %22, %21 : vector<16x1xf32>
    %c0_12 = arith.constant 0 : index
    %c0_13 = arith.constant 0 : index
    %24 = vector.load %arg4[%c0_12, %c0_13] : memref<1x16xf32, #tpu.memory_space<vmem>>, vector<1x16xf32>
    %25 = vector.broadcast %24 : vector<1x16xf32> to vector<16x16xf32>
    %26 = arith.mulf %13, %25 : vector<16x16xf32>
    %cst_14 = arith.constant dense<0.000000e+00> : vector<16xf32>
    %27 = vector.multi_reduction <add>, %26, %cst_14 [1] : vector<16x16xf32> to vector<16xf32>
    %28 = vector.shape_cast %27 : vector<16xf32> to vector<16x1xf32>
    %29 = arith.mulf %28, %23 : vector<16x1xf32>
    %c0_15 = arith.constant 0 : index
    %c0_16 = arith.constant 0 : index
    %30 = vector.load %arg5[%c0_15, %c0_16] : memref<1x1xf32, #tpu.memory_space<vmem>>, vector<1x1xf32>
    %31 = vector.broadcast %30 : vector<1x1xf32> to vector<16x1xf32>
    %32 = arith.addf %29, %31 : vector<16x1xf32>
    %33 = arith.negf %32 : vector<16x1xf32>
    %34 = math.exp %33 : vector<16x1xf32>
    %cst_17 = arith.constant 1.000000e+00 : f32
    %35 = vector.broadcast %cst_17 : f32 to vector<16x1xf32>
    %36 = arith.addf %35, %34 : vector<16x1xf32>
    %37 = arith.divf %35, %36 : vector<16x1xf32>
    %c0_18 = arith.constant 0 : index
    %c0_19 = arith.constant 0 : index
    %38 = vector.load %arg6[%c0_18, %c0_19] : memref<16x1xf32, #tpu.memory_space<vmem>>, vector<16x1xf32>
    tpu.vector_store %arg6[%c0_18, %c0_19], %37 {strides = array<i32>} : memref<16x1xf32, #tpu.memory_space<vmem>>, vector<16x1xf32>,
    return
  }
  func.func @transform_0(%arg0: i32) -> (i32, i32) {
    %c0_i32 = arith.constant 0 : i32
    %c0_i32_0 = arith.constant 0 : i32
    return %arg0, %c0_i32 : i32, i32
  }
  func.func @transform_1(%arg0: i32) -> (i32, i32) {
    %c0_i32 = arith.constant 0 : i32
    %c0_i32_0 = arith.constant 0 : i32
    %c0_i32_1 = arith.constant 0 : i32
    return %c0_i32, %c0_i32_0 : i32, i32
  }
  func.func @transform_2(%arg0: i32) -> (i32, i32) {
    %c0_i32 = arith.constant 0 : i32
    %c0_i32_0 = arith.constant 0 : i32
    %c0_i32_1 = arith.constant 0 : i32
    return %c0_i32, %c0_i32_0 : i32, i32
  }
  func.func @transform_3(%arg0: i32) -> (i32, i32) {
    %c0_i32 = arith.constant 0 : i32
    %c0_i32_0 = arith.constant 0 : i32
    %c0_i32_1 = arith.constant 0 : i32
    return %c0_i32, %c0_i32_0 : i32, i32
  }
  func.func @transform_4(%arg0: i32) -> (i32, i32) {
    %c0_i32 = arith.constant 0 : i32
    %c0_i32_0 = arith.constant 0 : i32
    %c0_i32_1 = arith.constant 0 : i32
    return %c0_i32, %c0_i32_0 : i32, i32
  }
  func.func @transform_5(%arg0: i32) -> (i32, i32) {
    %c0_i32 = arith.constant 0 : i32
    %c0_i32_0 = arith.constant 0 : i32
    return %arg0, %c0_i32 : i32, i32
  }
}

</mosaic_0001>

<llo_original>
// kernel: tpu_custom_call.1
$region0: #{tpu_custom_call.1}
  #allocation0 [shape = 'u32[]', space=smem, size = 0x4, offset = 0x4, fixed_abs, tag = 'smem constant byte address 0x4 - core index']
  #allocation1 [shape = 'u32[72,128]{1,0:T(1,128)}', space=vmem, size = 0x9000, scoped, tag = 'internal scratch']
  #allocation2 [shape = 'f32[1,1]{1,0:T(1,128)S(1)}', space=vmem, size = 0x200, scoped, tag = 'scoped memory for tpu_custom_call.1']
  %s0 = inlined_call_operand.vmem [shape: bf16[16,32], index: 0, kind: input, shape index: {}]
  %s1 = inlined_call_operand.vmem [shape: bf16[32,16], index: 1, kind: input, shape index: {}]
  %s2 = inlined_call_operand.vmem [shape: f32[1,16], index: 2, kind: input, shape index: {}]
  %s3 = inlined_call_operand.vmem [shape: f32[1,16], index: 3, kind: input, shape index: {}]
  %s4 = inlined_call_operand.<no memory space> [shape: f32[1,1], index: 4, kind: input, shape index: {}]
  %s5 = inlined_call_operand.vmem [shape: f32[16,1], index: 5, kind: output, shape index: {}]
  %s6 = sld [smem:[#allocation0]]
  $region30: #{tpu_custom_call.1} parent=0
    _
  %s8 = ssub.s32 1, %s6
  %s9 = scalar_select 0, %s8, %s6
  %v10 = vstv %s4
  %11 = vst [vmem:[#allocation2] sm:$0x1] %v10
  // Predicated region
  $region2: #{tpu_custom_call.1} parent=0 // pred_check
    _
  $region3: #{tpu_custom_call.1} parent=0 // pred_check_branch
    %13 = sbr.rel (0) target = $region5
  $region4: #{tpu_custom_call.1} parent=0 // pred_region
    _
  $region5: #{tpu_custom_call.1} parent=0 // pred_fallthru
    _
  // Predicated region
  $region6: #{tpu_custom_call.1} parent=0 // pred_check
    _
  $region7: #{tpu_custom_call.1} parent=0 // pred_check_branch
    %15 = sbr.rel (0) target = $region9
  $region8: #{tpu_custom_call.1} parent=0 // pred_region
    _
  $region9: #{tpu_custom_call.1} parent=0 // pred_fallthru
    _
  // Predicated region
  $region10: #{tpu_custom_call.1} parent=0 // pred_check
    _
  $region11: #{tpu_custom_call.1} parent=0 // pred_check_branch
    %17 = sbr.rel (0) target = $region13
  $region12: #{tpu_custom_call.1} parent=0 // pred_region
    _
  $region13: #{tpu_custom_call.1} parent=0 // pred_fallthru
    _
  // Predicated region
  $region14: #{tpu_custom_call.1} parent=0 // pred_check
    _
  $region15: #{tpu_custom_call.1} parent=0 // pred_check_branch
    %19 = sbr.rel (0) target = $region17
  $region16: #{tpu_custom_call.1} parent=0 // pred_region
    _
  $region17: #{tpu_custom_call.1} parent=0 // pred_fallthru
    _
  // Predicated region
  $region18: #{tpu_custom_call.1} parent=0 // pred_check
    _
  $region19: #{tpu_custom_call.1} parent=0 // pred_check_branch
    %21 = sbr.rel (0) target = $region21
  $region20: #{tpu_custom_call.1} parent=0 // pred_region
    _
  $region21: #{tpu_custom_call.1} parent=0 // pred_fallthru
    _
  %v23 = vld [vmem:[%s0] sm:$0xf]
  %v24 = vld [vmem:[%s0 + $0x4] sm:$0xf]
  %v25 = vld [vmem:[%s1] sm:$0xf]
  %v26 = vld [vmem:[%s1 + $0x4] sm:$0xf]
  %v27 = vld [vmem:[%s1 + $0x8] sm:$0xf]
  %v28 = vld [vmem:[%s1 + $0xc] sm:$0xf]
  %v29 = vld [vmem:[%s2] sm:$0x1]
  %v31 = vperm.slane %v29, 0
  %v35 = vunpack.c.l.b16 %v23
  %v36 = vunpack.c.l.b16 %v24
  %v37 = vpack.c.b16 %v36, %v35
  %v42 = vunpack.c.l.b16 %v25
  %v43 = vunpack.c.l.b16 %v26
  %v44 = vunpack.c.l.b16 %v27
  %v45 = vunpack.c.l.b16 %v28
  %v46 = vpack.c.b16 %v43, %v42
  %v47 = vpack.c.b16 %v45, %v44
  %vm50 = vcmask 261120
  %v52 = vsel %vm50, %v37, 0
  %54 = vmatpush.bf16.msra.mxu0 0
  %55 = vmatpush.bf16.msra.mxu0 0
  %56 = vmatpush.bf16.msra.mxu0 0
  %57 = vmatpush.bf16.msra.mxu0 0
  %58 = vmatpush.bf16.msra.mxu0 0
  %59 = vmatpush.bf16.msra.mxu0 0
  %60 = vmatpush.bf16.msra.mxu0 %v47
  %61 = vmatpush.bf16.msra.mxu0 %v46
  %62 = vmatmul.bf16.gmra.mxu0 %v52
  %v63 = vpop.f32.mrf.mxu0
  %v64 = vadd.f32 %v31, %v63
  %v65 = vpop.f32.mrf.mxu0
  %v66 = vadd.f32 %v31, %v65
  %67 = vdwg.mxu0
  %v68 = vmax.f32 %v64, 0.0
  %v69 = vmax.f32 %v66, 0.0
  %vm70 = vcmask 130048
  %v71 = vsel %vm70, %v68, 0.0
  %72 = vadd.xlane.f32.xlu0 %v71
  %v73 = vpop.xlane.xlu0 %72
  %v74 = vsel %vm70, %v69, 0.0
  %75 = vadd.xlane.f32.xlu0 %v74
  %v76 = vpop.xlane.xlu0 %75
  %v77 = vrcp.pop 16.0
  %v78 = vmul.f32 16.0, %v77
  %v79 = vsub.f32 1.0, %v78
  %v80 = vmul.f32 %v77, %v79
  %v81 = vadd.f32 %v77, %v80
  %vm82 = vweird.f32 %v77
  %v83 = vsel %vm82, %v77, %v81
  %v84 = vmul.f32 %v73, %v83
  %v85 = vmul.f32 %v76, %v83
  %v86 = vsub.f32 %v68, %v84
  %v87 = vsub.f32 %v69, %v85
  %v88 = vmul.f32 %v86, %v86
  %v89 = vmul.f32 %v87, %v87
  %v90 = vsel %vm70, %v88, 0.0
  %91 = vadd.xlane.f32.xlu0 %v90
  %v92 = vpop.xlane.xlu0 %91
  %v93 = vsel %vm70, %v89, 0.0
  %94 = vadd.xlane.f32.xlu0 %v93
  %v95 = vpop.xlane.xlu0 %94
  %v96 = vmul.f32 %v92, 0.06666667
  %v97 = vmul.f32 %v95, 0.06666667
  %v98 = vrsqrt.pop %v96
  %v99 = vmul.f32 %v98, %v96
  %v100 = vmul.f32 %v99, %v98
  %v101 = vmul.f32 0.5, %v100
  %v102 = vsub.f32 1.5, %v101
  %v103 = vmul.f32 %v98, %v102
  %v104 = vmul.f32 %v96, %v103
  %vm105 = vcmp.eq.f32.partialorder %v96, inf
  %v106 = vsel %vm105, %v96, %v104
  %vm107 = vcmp.eq.f32.partialorder %v96, 0.0
  %v108 = vand.u32 %v96, 2147483648
  %v109 = vsel %vm107, %v108, %v106
  %v110 = vrsqrt.pop %v97
  %v111 = vmul.f32 %v110, %v97
  %v112 = vmul.f32 %v111, %v110
  %v113 = vmul.f32 0.5, %v112
  %v114 = vsub.f32 1.5, %v113
  %v115 = vmul.f32 %v110, %v114
  %v116 = vmul.f32 %v97, %v115
  %vm117 = vcmp.eq.f32.partialorder %v97, inf
  %v118 = vsel %vm117, %v97, %v116
  %vm119 = vcmp.eq.f32.partialorder %v97, 0.0
  %v120 = vand.u32 %v97, 2147483648
  %v121 = vsel %vm119, %v120, %v118
  %v122 = vadd.f32 %v109, 1e-06
  %v123 = vadd.f32 %v121, 1e-06
  %v124 = vrcp.pop %v122
  %v125 = vmul.f32 %v122, %v124
  %v126 = vsub.f32 1.0, %v125
  %v127 = vmul.f32 %v124, %v126
  %v128 = vadd.f32 %v124, %v127
  %vm129 = vweird.f32 %v122
  %vm130 = vweird.f32 %v124
  %vm131 = vmor %vm129, %vm130
  %v132 = vsel %vm131, %v124, %v128
  %v133 = vand.u32 2147483647, %v122
  %vm134 = vcmp.eq.f32.partialorder %v133, 8.507059e+37
  %v135 = vand.u32 %v122, 2147483648
  %v136 = vor.u32 1.1754944e-38, %v135
  %v137 = vsel %vm134, %v136, %v132
  %v138 = vmul.f32 1.0, %v137
  %v139 = vrcp.pop %v123
  %v140 = vmul.f32 %v123, %v139
  %v141 = vsub.f32 1.0, %v140
  %v142 = vmul.f32 %v139, %v141
  %v143 = vadd.f32 %v139, %v142
  %vm144 = vweird.f32 %v123
  %vm145 = vweird.f32 %v139
  %vm146 = vmor %vm144, %vm145
  %v147 = vsel %vm146, %v139, %v143
  %v148 = vand.u32 2147483647, %v123
  %vm149 = vcmp.eq.f32.partialorder %v148, 8.507059e+37
  %v150 = vand.u32 %v123, 2147483648
  %v151 = vor.u32 1.1754944e-38, %v150
  %v152 = vsel %vm149, %v151, %v147
  %v153 = vmul.f32 1.0, %v152
  %v154 = vld [vmem:[%s3] sm:$0x1]
  %v156 = vperm.slane %v154, 0
  %v158 = vmul.f32 %v86, %v156
  %v159 = vmul.f32 %v87, %v156
  %v160 = vsel %vm70, %v158, 0.0
  %161 = vadd.xlane.f32.xlu0 %v160
  %v162 = vpop.xlane.xlu0 %161
  %v163 = vsel %vm70, %v159, 0.0
  %164 = vadd.xlane.f32.xlu0 %v163
  %v165 = vpop.xlane.xlu0 %164
  %v166 = vmul.f32 %v162, %v138
  %v167 = vmul.f32 %v165, %v153
  %v168 = vld [vmem:[#allocation2] sm:$0x1]
  %v170 = vperm.slane %v168, 0
  %v172 = vadd.f32 %v166, %v170
  %v173 = vadd.f32 %v167, %v170
  %v174 = vxor.u32 %v172, 2147483648
  %v175 = vxor.u32 %v173, 2147483648
  %v176 = vmul.f32 %v174, 1.442695
  %v177 = vpow.pop %v176
  %v178 = vmul.f32 %v175, 1.442695
  %v179 = vpow.pop %v178
  %v180 = vadd.f32 %v177, 1.0
  %v181 = vadd.f32 %v179, 1.0
  %v182 = vrcp.pop %v180
  %v183 = vmul.f32 %v180, %v182
  %v184 = vsub.f32 1.0, %v183
  %v185 = vmul.f32 %v182, %v184
  %v186 = vadd.f32 %v182, %v185
  %vm187 = vweird.f32 %v180
  %vm188 = vweird.f32 %v182
  %vm189 = vmor %vm187, %vm188
  %v190 = vsel %vm189, %v182, %v186
  %v191 = vand.u32 2147483647, %v180
  %vm192 = vcmp.eq.f32.partialorder %v191, 8.507059e+37
  %v193 = vand.u32 %v180, 2147483648
  %v194 = vor.u32 1.1754944e-38, %v193
  %v195 = vsel %vm192, %v194, %v190
  %v196 = vmul.f32 1.0, %v195
  %v197 = vrcp.pop %v181
  %v198 = vmul.f32 %v181, %v197
  %v199 = vsub.f32 1.0, %v198
  %v200 = vmul.f32 %v197, %v199
  %v201 = vadd.f32 %v197, %v200
  %vm202 = vweird.f32 %v181
  %vm203 = vweird.f32 %v197
  %vm204 = vmor %vm202, %vm203
  %v205 = vsel %vm204, %v197, %v201
  %v206 = vand.u32 2147483647, %v181
  %vm207 = vcmp.eq.f32.partialorder %v206, 8.507059e+37
  %v208 = vand.u32 %v181, 2147483648
  %v209 = vor.u32 1.1754944e-38, %v208
  %v210 = vsel %vm207, %v209, %v205
  %v211 = vmul.f32 1.0, %v210
  %vm212 = vcmask 7168
  %213 = vst.msk [vmem:[%s5] sm:$0xff] %vm212, %v196
  %214 = vst.msk [vmem:[%s5 + $0x8] sm:$0xff] %vm212, %v211
  // Predicated region
  $region22: #{tpu_custom_call.1} parent=0 // pred_check
    _
  $region23: #{tpu_custom_call.1} parent=0 // pred_check_branch
    %216 = sbr.rel (0) target = $region25
  $region24: #{tpu_custom_call.1} parent=0 // pred_region
    _
  $region25: #{tpu_custom_call.1} parent=0 // pred_fallthru
    _
  // Predicated region
  $region26: #{tpu_custom_call.1} parent=0 // pred_check
    _
  $region27: #{tpu_custom_call.1} parent=0 // pred_check_branch
    %218 = sbr.rel (0) target = $region29
  $region28: #{tpu_custom_call.1} parent=0 // pred_region
    _
  $region29: #{tpu_custom_call.1} parent=0 // pred_fallthru
    _

// kernel: tpu_custom_call.1
$region0: #{tpu_custom_call.1}
  #allocation0 [shape = 'u32[]', space=smem, size = 0x4, offset = 0x4, fixed_abs, tag = 'smem constant byte address 0x4 - core index']
  #allocation1 [shape = 'u32[72,128]{1,0:T(1,128)}', space=vmem, size = 0x9000, scoped, tag = 'internal scratch']
  #allocation2 [shape = 'f32[1,1]{1,0:T(1,128)S(1)}', space=vmem, size = 0x200, scoped, tag = 'scoped memory for tpu_custom_call.1']
  %s0 = inlined_call_operand.vmem [shape: bf16[16,32], index: 0, kind: input, shape index: {}]
  %s1 = inlined_call_operand.vmem [shape: bf16[32,16], index: 1, kind: input, shape index: {}]
  %s2 = inlined_call_operand.vmem [shape: f32[1,16], index: 2, kind: input, shape index: {}]
  %s3 = inlined_call_operand.vmem [shape: f32[1,16], index: 3, kind: input, shape index: {}]
  %s4 = inlined_call_operand.<no memory space> [shape: f32[1,1], index: 4, kind: input, shape index: {}]
  %s5 = inlined_call_operand.vmem [shape: f32[16,1], index: 5, kind: output, shape index: {}]
  %s6 = sld [smem:[#allocation0]]
  $region30: #{tpu_custom_call.1} parent=0
    _
  %s8 = ssub.s32 1, %s6
  %s9 = scalar_select 0, %s8, %s6
  %v10 = vstv %s4
  %11 = vst [vmem:[#allocation2] sm:$0x1] %v10
  // Predicated region
  $region2: #{tpu_custom_call.1} parent=0 // pred_check
    _
  $region3: #{tpu_custom_call.1} parent=0 // pred_check_branch
    %13 = sbr.rel (0) target = $region5
  $region4: #{tpu_custom_call.1} parent=0 // pred_region
    _
  $region5: #{tpu_custom_call.1} parent=0 // pred_fallthru
    _
  // Predicated region
  $region6: #{tpu_custom_call.1} parent=0 // pred_check
    _
  $region7: #{tpu_custom_call.1} parent=0 // pred_check_branch
    %15 = sbr.rel (0) target = $region9
  $region8: #{tpu_custom_call.1} parent=0 // pred_region
    _
  $region9: #{tpu_custom_call.1} parent=0 // pred_fallthru
    _
  // Predicated region
  $region10: #{tpu_custom_call.1} parent=0 // pred_check
    _
  $region11: #{tpu_custom_call.1} parent=0 // pred_check_branch
    %17 = sbr.rel (0) target = $region13
  $region12: #{tpu_custom_call.1} parent=0 // pred_region
    _
  $region13: #{tpu_custom_call.1} parent=0 // pred_fallthru
    _
  // Predicated region
  $region14: #{tpu_custom_call.1} parent=0 // pred_check
    _
  $region15: #{tpu_custom_call.1} parent=0 // pred_check_branch
    %19 = sbr.rel (0) target = $region17
  $region16: #{tpu_custom_call.1} parent=0 // pred_region
    _
  $region17: #{tpu_custom_call.1} parent=0 // pred_fallthru
    _
  // Predicated region
  $region18: #{tpu_custom_call.1} parent=0 // pred_check
    _
  $region19: #{tpu_custom_call.1} parent=0 // pred_check_branch
    %21 = sbr.rel (0) target = $region21
  $region20: #{tpu_custom_call.1} parent=0 // pred_region
    _
  $region21: #{tpu_custom_call.1} parent=0 // pred_fallthru
    _
  %v23 = vld [vmem:[%s0] sm:$0xf]
  %v24 = vld [vmem:[%s0 + $0x4] sm:$0xf]
  %v25 = vld [vmem:[%s1] sm:$0xf]
  %v26 = vld [vmem:[%s1 + $0x4] sm:$0xf]
  %v27 = vld [vmem:[%s1 + $0x8] sm:$0xf]
  %v28 = vld [vmem:[%s1 + $0xc] sm:$0xf]
  %v29 = vld [vmem:[%s2] sm:$0x1]
  %v31 = vperm.slane %v29, 0
  %v35 = vunpack.c.l.b16 %v23
  %v36 = vunpack.c.l.b16 %v24
  %v37 = vpack.c.b16 %v36, %v35
  %v42 = vunpack.c.l.b16 %v25
  %v43 = vunpack.c.l.b16 %v26
  %v44 = vunpack.c.l.b16 %v27
  %v45 = vunpack.c.l.b16 %v28
  %v46 = vpack.c.b16 %v43, %v42
  %v47 = vpack.c.b16 %v45, %v44
  %vm50 = vcmask 261120
  %v52 = vsel %vm50, %v37, 0
  %54 = vmatpush.bf16.msra.mxu0 0
  %55 = vmatpush.bf16.msra.mxu0 0
  %56 = vmatpush.bf16.msra.mxu0 0
  %57 = vmatpush.bf16.msra.mxu0 0
  %58 = vmatpush.bf16.msra.mxu0 0
  %59 = vmatpush.bf16.msra.mxu0 0
  %60 = vmatpush.bf16.msra.mxu0 %v47
  %61 = vmatpush.bf16.msra.mxu0 %v46
  %62 = vmatmul.bf16.gmra.mxu0 %v52
  %v63 = vpop.f32.mrf.mxu0
  %v64 = vadd.f32 %v31, %v63
  %v65 = vpop.f32.mrf.mxu0
  %v66 = vadd.f32 %v31, %v65
  %67 = vdwg.mxu0
  %v68 = vmax.f32 %v64, 0.0
  %v69 = vmax.f32 %v66, 0.0
  %vm70 = vcmask 130048
  %v71 = vsel %vm70, %v68, 0.0
  %72 = vadd.xlane.f32.xlu0 %v71
  %v73 = vpop.xlane.xlu0 %72
  %v74 = vsel %vm70, %v69, 0.0
  %75 = vadd.xlane.f32.xlu0 %v74
  %v76 = vpop.xlane.xlu0 %75
  %v77 = vrcp.pop 16.0
  %v78 = vmul.f32 16.0, %v77
  %v79 = vsub.f32 1.0, %v78
  %v80 = vmul.f32 %v77, %v79
  %v81 = vadd.f32 %v77, %v80
  %vm82 = vweird.f32 %v77
  %v83 = vsel %vm82, %v77, %v81
  %v84 = vmul.f32 %v73, %v83
  %v85 = vmul.f32 %v76, %v83
  %v86 = vsub.f32 %v68, %v84
  %v87 = vsub.f32 %v69, %v85
  %v88 = vmul.f32 %v86, %v86
  %v89 = vmul.f32 %v87, %v87
  %v90 = vsel %vm70, %v88, 0.0
  %91 = vadd.xlane.f32.xlu0 %v90
  %v92 = vpop.xlane.xlu0 %91
  %v93 = vsel %vm70, %v89, 0.0
  %94 = vadd.xlane.f32.xlu0 %v93
  %v95 = vpop.xlane.xlu0 %94
  %v96 = vmul.f32 %v92, 0.06666667
  %v97 = vmul.f32 %v95, 0.06666667
  %v98 = vrsqrt.pop %v96
  %v99 = vmul.f32 %v98, %v96
  %v100 = vmul.f32 %v99, %v98
  %v101 = vmul.f32 0.5, %v100
  %v102 = vsub.f32 1.5, %v101
  %v103 = vmul.f32 %v98, %v102
  %v104 = vmul.f32 %v96, %v103
  %vm105 = vcmp.eq.f32.partialorder %v96, inf
  %v106 = vsel %vm105, %v96, %v104
  %vm107 = vcmp.eq.f32.partialorder %v96, 0.0
  %v108 = vand.u32 %v96, 2147483648
  %v109 = vsel %vm107, %v108, %v106
  %v110 = vrsqrt.pop %v97
  %v111 = vmul.f32 %v110, %v97
  %v112 = vmul.f32 %v111, %v110
  %v113 = vmul.f32 0.5, %v112
  %v114 = vsub.f32 1.5, %v113
  %v115 = vmul.f32 %v110, %v114
  %v116 = vmul.f32 %v97, %v115
  %vm117 = vcmp.eq.f32.partialorder %v97, inf
  %v118 = vsel %vm117, %v97, %v116
  %vm119 = vcmp.eq.f32.partialorder %v97, 0.0
  %v120 = vand.u32 %v97, 2147483648
  %v121 = vsel %vm119, %v120, %v118
  %v122 = vadd.f32 %v109, 1e-06
  %v123 = vadd.f32 %v121, 1e-06
  %v124 = vrcp.pop %v122
  %v125 = vmul.f32 %v122, %v124
  %v126 = vsub.f32 1.0, %v125
  %v127 = vmul.f32 %v124, %v126
  %v128 = vadd.f32 %v124, %v127
  %vm129 = vweird.f32 %v122
  %vm130 = vweird.f32 %v124
  %vm131 = vmor %vm129, %vm130
  %v132 = vsel %vm131, %v124, %v128
  %v133 = vand.u32 2147483647, %v122
  %vm134 = vcmp.eq.f32.partialorder %v133, 8.507059e+37
  %v135 = vand.u32 %v122, 2147483648
  %v136 = vor.u32 1.1754944e-38, %v135
  %v137 = vsel %vm134, %v136, %v132
  %v138 = vmul.f32 1.0, %v137
  %v139 = vrcp.pop %v123
  %v140 = vmul.f32 %v123, %v139
  %v141 = vsub.f32 1.0, %v140
  %v142 = vmul.f32 %v139, %v141
  %v143 = vadd.f32 %v139, %v142
  %vm144 = vweird.f32 %v123
  %vm145 = vweird.f32 %v139
  %vm146 = vmor %vm144, %vm145
  %v147 = vsel %vm146, %v139, %v143
  %v148 = vand.u32 2147483647, %v123
  %vm149 = vcmp.eq.f32.partialorder %v148, 8.507059e+37
  %v150 = vand.u32 %v123, 2147483648
  %v151 = vor.u32 1.1754944e-38, %v150
  %v152 = vsel %vm149, %v151, %v147
  %v153 = vmul.f32 1.0, %v152
  %v154 = vld [vmem:[%s3] sm:$0x1]
  %v156 = vperm.slane %v154, 0
  %v158 = vmul.f32 %v86, %v156
  %v159 = vmul.f32 %v87, %v156
  %v160 = vsel %vm70, %v158, 0.0
  %161 = vadd.xlane.f32.xlu0 %v160
  %v162 = vpop.xlane.xlu0 %161
  %v163 = vsel %vm70, %v159, 0.0
  %164 = vadd.xlane.f32.xlu0 %v163
  %v165 = vpop.xlane.xlu0 %164
  %v166 = vmul.f32 %v162, %v138
  %v167 = vmul.f32 %v165, %v153
  %v168 = vld [vmem:[#allocation2] sm:$0x1]
  %v170 = vperm.slane %v168, 0
  %v172 = vadd.f32 %v166, %v170
  %v173 = vadd.f32 %v167, %v170
  %v174 = vxor.u32 %v172, 2147483648
  %v175 = vxor.u32 %v173, 2147483648
  %v176 = vmul.f32 %v174, 1.442695
  %v177 = vpow.pop %v176
  %v178 = vmul.f32 %v175, 1.442695
  %v179 = vpow.pop %v178
  %v180 = vadd.f32 %v177, 1.0
  %v181 = vadd.f32 %v179, 1.0
  %v182 = vrcp.pop %v180
  %v183 = vmul.f32 %v180, %v182
  %v184 = vsub.f32 1.0, %v183
  %v185 = vmul.f32 %v182, %v184
  %v186 = vadd.f32 %v182, %v185
  %vm187 = vweird.f32 %v180
  %vm188 = vweird.f32 %v182
  %vm189 = vmor %vm187, %vm188
  %v190 = vsel %vm189, %v182, %v186
  %v191 = vand.u32 2147483647, %v180
  %vm192 = vcmp.eq.f32.partialorder %v191, 8.507059e+37
  %v193 = vand.u32 %v180, 2147483648
  %v194 = vor.u32 1.1754944e-38, %v193
  %v195 = vsel %vm192, %v194, %v190
  %v196 = vmul.f32 1.0, %v195
  %v197 = vrcp.pop %v181
  %v198 = vmul.f32 %v181, %v197
  %v199 = vsub.f32 1.0, %v198
  %v200 = vmul.f32 %v197, %v199
  %v201 = vadd.f32 %v197, %v200
  %vm202 = vweird.f32 %v181
  %vm203 = vweird.f32 %v197
  %vm204 = vmor %vm202, %vm203
  %v205 = vsel %vm204, %v197, %v201
  %v206 = vand.u32 2147483647, %v181
  %vm207 = vcmp.eq.f32.partialorder %v206, 8.507059e+37
  %v208 = vand.u32 %v181, 2147483648
  %v209 = vor.u32 1.1754944e-38, %v208
  %v210 = vsel %vm207, %v209, %v205
  %v211 = vmul.f32 1.0, %v210
  %vm212 = vcmask 7168
  %213 = vst.msk [vmem:[%s5] sm:$0xff] %vm212, %v196
  %214 = vst.msk [vmem:[%s5 + $0x8] sm:$0xff] %vm212, %v211
  // Predicated region
  $region22: #{tpu_custom_call.1} parent=0 // pred_check
    _
  $region23: #{tpu_custom_call.1} parent=0 // pred_check_branch
    %216 = sbr.rel (0) target = $region25
  $region24: #{tpu_custom_call.1} parent=0 // pred_region
    _
  $region25: #{tpu_custom_call.1} parent=0 // pred_fallthru
    _
  // Predicated region
  $region26: #{tpu_custom_call.1} parent=0 // pred_check
    _
  $region27: #{tpu_custom_call.1} parent=0 // pred_check_branch
    %218 = sbr.rel (0) target = $region29
  $region28: #{tpu_custom_call.1} parent=0 // pred_region
    _
  $region29: #{tpu_custom_call.1} parent=0 // pred_fallthru
    _

</llo_original>
